<compile_context>
chip_gen: v5e
topology: v5e:2x2
jax: 0.10.0
libtpu: 0.0.40
codegen_flags: <defaults>
</compile_context>

<pallas_src>
import jax
import jax.numpy as jnp
from jax.experimental import pallas as pl
from jax.experimental.pallas import tpu as pltpu


def _make_focal_kernel(alpha, gamma, n_rows, tile_n, needs_mask):
    alpha = float(alpha)
    gamma = float(gamma)

    def kernel(tgt_ref, x_ref, out_ref):
        x = x_ref[...].astype(jnp.float32)            # (TILE_N, C) f32 working copy
        tgt = tgt_ref[...]                            # (TILE_N, 1) int32 class ids

        # Numerically stable softmax statistics over the class (lane) axis.
        m = jnp.max(x, axis=-1, keepdims=True)        # (TILE_N, 1)
        e = jnp.exp(x - m)                            # (TILE_N, C) -- the only big exp
        s = jnp.sum(e, axis=-1, keepdims=True)        # (TILE_N, 1)

        # In-kernel one-hot mask (cheap VPU filler; no dense one-hot HBM stream).
        class_ids = jax.lax.broadcasted_iota(jnp.int32, x.shape, 1)
        mask = class_ids == tgt                       # (TILE_N, C)
        tgt_logit = jnp.sum(jnp.where(mask, x, 0.0), axis=-1, keepdims=True)

        ce = jnp.log(s) - (tgt_logit - m)             # stable per-row cross entropy
        # pt = exp(-ce): tiny (TILE_N, 1) exp on the EUP slot; replaces the second
        # full (TILE_N, C) masked cross-lane reduction of the previous version.
        pt = jnp.exp(-ce)
        omp = jnp.maximum(1.0 - pt, 0.0)              # clamp tiny negative round-off

        if gamma == 2.0:
            w = omp * omp                             # VPU multiply, no pow
        elif gamma == float(int(gamma)) and gamma >= 0.0:
            w = omp ** int(gamma)                     # integer pow -> repeated mults
        else:
            w = jnp.power(omp, jnp.float32(gamma))    # base clamped >= 0, NaN-safe

        focal = jnp.float32(alpha) * w * ce           # (TILE_N, 1) per-row focal terms

        if needs_mask:
            # Ragged last block: explicitly zero rows beyond N before the block sum
            # (OOB rows may hold garbage -> NaN/inf; select-zero keeps them out).
            row_ids = (pl.program_id(0) * tile_n
                       + jax.lax.broadcasted_iota(jnp.int32, focal.shape, 0))
            focal = jnp.where(row_ids < n_rows, focal, 0.0)

        # One partial sum per grid block: sublane (XLU) reduce -> (1, 1) store.
        out_ref[...] = jnp.sum(focal, axis=0, keepdims=True)

    return kernel


def _vmem_limit_bytes():
    """Per-generation scoped-VMEM limit (explicit, so large tiles don't hit defaults)."""
    try:
        cap = int(pltpu.get_tpu_info().vmem_capacity_bytes)   # 128 MiB v5e/v6e, 64 MiB v7x
    except Exception:
        cap = 64 * 1024 * 1024                                # conservative fallback
    # Leave headroom for Mosaic-internal scratch / semaphores.
    return min(int(cap * 0.7), 96 * 1024 * 1024)


def _choose_tile_n(n, c, itemsize, vmem_limit_bytes):
    """Byte-budgeted TILE_N from an honest per-row VMEM live-set model."""
    bytes_per_row = (
        2 * c * itemsize      # double-buffered logits tiles (native dtype)
        + 3 * c * 4           # in-kernel f32 copy of x, e, and one select temporary
        + 2 * 128 * 4         # (TILE_N, 1) int32 targets, lane-padded to 128, x2 buffers
        + 4 * 128 * 4         # a few live lane-padded (TILE_N, 1) f32 row statistics
    )
    budget = int(vmem_limit_bytes * 0.6)   # keep the live set well under the limit
    tile = budget // max(bytes_per_row, 1)
    tile = max(32, min(32768, tile))       # cap at 32k rows; floor at one f32/bf16 sub-block
    tile = (tile // 32) * 32               # sublane-friendly for f32 (8) / bf16 (16) / int8 (32)
    if tile >= n:
        return n
    return tile


def focal_loss(inputs, targets, alpha=0.25, gamma=2.0, tile_n=None):
    """inputs: (N, C) float logits (f32/bf16), targets: (N,) int class ids. Returns scalar f32."""
    n, c = inputs.shape
    itemsize = inputs.dtype.itemsize
    vmem_limit = _vmem_limit_bytes()

    if tile_n is None:
        tile_n = _choose_tile_n(n, c, itemsize, vmem_limit)
    tile_n = int(min(tile_n, n))
    if tile_n < n:
        tile_n = max(32, (tile_n // 32) * 32)   # multiple of 32 (bf16/int8 sublane packing)
        tile_n = min(tile_n, n)

    num_blocks = pl.cdiv(n, tile_n)
    needs_mask = (n % tile_n) != 0

    tgt2d = targets.astype(jnp.int32).reshape(n, 1)   # tiny int32 column, no dense one-hot

    cost = pl.CostEstimate(
        flops=8 * n * c,                       # max/sub/exp-arith/select/sum per element (approx)
        transcendentals=n * c + 2 * n,         # big exp + per-row log(s) + exp(-ce)
        bytes_accessed=n * c * itemsize + n * 4 + num_blocks * 4,
    )

    partial = pl.pallas_call(
        _make_focal_kernel(alpha, gamma, n, tile_n, needs_mask),
        out_shape=jax.ShapeDtypeStruct((num_blocks, 1), jnp.float32),
        grid=(num_blocks,),
        in_specs=[
            pl.BlockSpec((tile_n, 1), lambda i: (i, 0)),   # int32 targets column
            pl.BlockSpec((tile_n, c), lambda i: (i, 0)),   # logits in original dtype
        ],
        out_specs=pl.BlockSpec((1, 1), lambda i: (i, 0)),  # one partial sum per block
        compiler_params=pltpu.CompilerParams(
            dimension_semantics=("parallel",),             # independent blocks over N
            vmem_limit_bytes=vmem_limit,
        ),
        cost_estimate=cost,
    )(tgt2d, inputs)

    # Final mean: trivial reduction over num_blocks partial sums (not over N).
    return jnp.sum(partial) / jnp.float32(n)


def focal_loss_ref(inputs, targets, alpha=0.25, gamma=2.0):
    """Pure-JAX reference matching the PyTorch module."""
    x = inputs.astype(jnp.float32)
    logp = jax.nn.log_softmax(x, axis=-1)
    ce = -jnp.take_along_axis(logp, targets[:, None].astype(jnp.int32), axis=-1)[:, 0]
    pt = jnp.exp(-ce)
    return jnp.mean(alpha * (1.0 - pt) ** gamma * ce)


if __name__ == "__main__":
    key = jax.random.PRNGKey(0)
    k1, k2, k3, k4 = jax.random.split(key, 4)

    # --- case 1: small single-tile, f32 (batch=8, classes=32) ---
    N, C = 8, 32
    logits = jax.random.normal(k1, (N, C), dtype=jnp.float32)
    targets = jax.random.randint(k2, (N,), 0, C, dtype=jnp.int32)
    loss = focal_loss(logits, targets)
    jax.block_until_ready(loss)
    ref = focal_loss_ref(logits, targets)
    assert jnp.allclose(loss, ref, atol=1e-5, rtol=1e-5), (loss, ref)

    # --- case 2: multi-block grid with a ragged last block (in-kernel row masking) ---
    N2, C2 = 50, 32
    logits2 = jax.random.normal(k3, (N2, C2), dtype=jnp.float32) * 3.0
    targets2 = jax.random.randint(k4, (N2,), 0, C2, dtype=jnp.int32)
    loss2 = focal_loss(logits2, targets2, tile_n=16)   # forces >1 block + ragged tail
    jax.block_until_ready(loss2)
    ref2 = focal_loss_ref(logits2, targets2)
    assert jnp.allclose(loss2, ref2, atol=1e-5, rtol=1e-5), (loss2, ref2)

    # --- case 3: bf16 logits streamed without any wrapper upcast ---
    logits_bf16 = logits.astype(jnp.bfloat16)
    loss3 = focal_loss(logits_bf16, targets)
    jax.block_until_ready(loss3)
    ref3 = focal_loss_ref(logits_bf16, targets)   # reference sees the same bf16-quantized values
    assert jnp.allclose(loss3, ref3, atol=1e-5, rtol=1e-5), (loss3, ref3)

    print("KERNEL_OK")
</pallas_src>

<mosaic_0001>
module attributes {stable_mosaic.version = 11 : i64} {
  func.func @kernel(%arg0: i32, %arg1: memref<8x1xi32, #tpu.memory_space<vmem>>, %arg2: memref<8x32xf32, #tpu.memory_space<vmem>>, %arg3: memref<1x1xf32, #tpu.memory_space<vmem>>) attributes {dimension_semantics = [#tpu.dimension_semantics<parallel>], iteration_bounds = array<i64: 1>, scalar_prefetch = 0 : i64, scratch_operands = 0 : i64, tpu.core_type = #tpu.core_type<tc>, window_params = [{transform_indices = @transform_0, window_bounds = array<i64: 8, 1>}, {transform_indices = @transform_1, window_bounds = array<i64: 8, 32>}, {transform_indices = @transform_2, window_bounds = array<i64: 1, 1>}]} {
    %c0 = arith.constant 0 : index
    %c0_0 = arith.constant 0 : index
    %0 = vector.load %arg2[%c0, %c0_0] : memref<8x32xf32, #tpu.memory_space<vmem>>, vector<8x32xf32>
    %c0_1 = arith.constant 0 : index
    %c0_2 = arith.constant 0 : index
    %1 = vector.load %arg1[%c0_1, %c0_2] : memref<8x1xi32, #tpu.memory_space<vmem>>, vector<8x1xi32>
    %cst = arith.constant dense<0xFF800000> : vector<8xf32>
    %2 = vector.multi_reduction <maximumf>, %0, %cst [1] : vector<8x32xf32> to vector<8xf32>
    %3 = vector.shape_cast %2 : vector<8xf32> to vector<8x1xf32>
    %4 = vector.broadcast %3 : vector<8x1xf32> to vector<8x32xf32>
    %5 = arith.subf %0, %4 : vector<8x32xf32>
    %6 = math.exp %5 : vector<8x32xf32>
    %cst_3 = arith.constant dense<0.000000e+00> : vector<8xf32>
    %7 = vector.multi_reduction <add>, %6, %cst_3 [1] : vector<8x32xf32> to vector<8xf32>
    %8 = vector.shape_cast %7 : vector<8xf32> to vector<8x1xf32>
    %9 = tpu.iota {dimensions = array<i32: 1>} : vector<8x32xi32>
    %10 = vector.broadcast %1 : vector<8x1xi32> to vector<8x32xi32>
    %11 = arith.cmpi eq, %9, %10 : vector<8x32xi32>
    %cst_4 = arith.constant 0.000000e+00 : f32
    %12 = vector.broadcast %cst_4 : f32 to vector<8x32xf32>
    %13 = arith.select %11, %0, %12 : vector<8x32xi1>, vector<8x32xf32>
    %cst_5 = arith.constant dense<0.000000e+00> : vector<8xf32>
    %14 = vector.multi_reduction <add>, %13, %cst_5 [1] : vector<8x32xf32> to vector<8xf32>
    %15 = vector.shape_cast %14 : vector<8xf32> to vector<8x1xf32>
    %16 = math.log %8 : vector<8x1xf32>
    %17 = arith.subf %15, %3 : vector<8x1xf32>
    %18 = arith.subf %16, %17 : vector<8x1xf32>
    %cst_6 = arith.constant 0.000000e+00 : f32
    %19 = vector.broadcast %cst_6 : f32 to vector<8x1xf32>
    %20 = arith.subf %19, %18 : vector<8x1xf32>
    %21 = math.exp %20 : vector<8x1xf32>
    %cst_7 = arith.constant 1.000000e+00 : f32
    %22 = vector.broadcast %cst_7 : f32 to vector<8x1xf32>
    %23 = arith.subf %22, %21 : vector<8x1xf32>
    %cst_8 = arith.constant 0.000000e+00 : f32
    %24 = vector.broadcast %cst_8 : f32 to vector<8x1xf32>
    %25 = arith.maximumf %23, %24 : vector<8x1xf32>
    %26 = arith.mulf %25, %25 : vector<8x1xf32>
    %cst_9 = arith.constant 2.500000e-01 : f32
    %27 = vector.broadcast %cst_9 : f32 to vector<8x1xf32>
    %28 = arith.mulf %27, %26 : vector<8x1xf32>
    %29 = arith.mulf %28, %18 : vector<8x1xf32>
    %cst_10 = arith.constant dense<0.000000e+00> : vector<1xf32>
    %30 = vector.multi_reduction <add>, %29, %cst_10 [0] : vector<8x1xf32> to vector<1xf32>
    %31 = vector.shape_cast %30 : vector<1xf32> to vector<1x1xf32>
    %c0_11 = arith.constant 0 : index
    %c0_12 = arith.constant 0 : index
    %32 = vector.load %arg3[%c0_11, %c0_12] : memref<1x1xf32, #tpu.memory_space<vmem>>, vector<1x1xf32>
    tpu.vector_store %arg3[%c0_11, %c0_12], %31 {strides = array<i32>} : memref<1x1xf32, #tpu.memory_space<vmem>>, vector<1x1xf32>,
    return
  }
  func.func @transform_0(%arg0: i32) -> (i32, i32) {
    %c0_i32 = arith.constant 0 : i32
    %c0_i32_0 = arith.constant 0 : i32
    return %arg0, %c0_i32 : i32, i32
  }
  func.func @transform_1(%arg0: i32) -> (i32, i32) {
    %c0_i32 = arith.constant 0 : i32
    %c0_i32_0 = arith.constant 0 : i32
    return %arg0, %c0_i32 : i32, i32
  }
  func.func @transform_2(%arg0: i32) -> (i32, i32) {
    %c0_i32 = arith.constant 0 : i32
    %c0_i32_0 = arith.constant 0 : i32
    return %arg0, %c0_i32 : i32, i32
  }
}

</mosaic_0001>

<llo_original>
// kernel: tpu_custom_call.1
$region0: #{tpu_custom_call.1}
  #allocation0 [shape = 'u32[]', space=smem, size = 0x4, offset = 0x4, fixed_abs, tag = 'smem constant byte address 0x4 - core index']
  #allocation1 [shape = 'u32[72,128]{1,0:T(1,128)}', space=vmem, size = 0x9000, scoped, tag = 'internal scratch']
  %s0 = inlined_call_operand.vmem [shape: s32[8,1], index: 0, kind: input, shape index: {}]
  %s1 = inlined_call_operand.vmem [shape: f32[8,32], index: 1, kind: input, shape index: {}]
  %s2 = inlined_call_operand.hbm [shape: f32[1,1], index: 2, kind: output, shape index: {}]
  %s3 = sld [smem:[#allocation0]]
  $region18: #{tpu_custom_call.1} parent=0
    _
  %s5 = ssub.s32 1, %s3
  %s6 = scalar_select 0, %s5, %s3
  $region1: #{tpu_custom_call.1} parent=0
    #allocation2 [shape = 'u8[512]{0}', space=vmem, size = 0x400, scoped, tag = 'output window, operand 0, single buffered']
    #allocation3 [shape = 's32[1]{0}', space=sflag, size = 0x4, scoped, tag = 'scoped memory for tpu_custom_call.1']
    %7 = vsyncpa [#allocation3], 0
    // Predicated region
    $region2: #{tpu_custom_call.1} parent=1 // pred_check
      _
    $region3: #{tpu_custom_call.1} parent=1 // pred_check_branch
      %9 = sbr.rel (0) target = $region5
    $region4: #{tpu_custom_call.1} parent=1 // pred_region
      _
    $region5: #{tpu_custom_call.1} parent=1 // pred_fallthru
      _
    // Predicated region
    $region6: #{tpu_custom_call.1} parent=1 // pred_check
      _
    $region7: #{tpu_custom_call.1} parent=1 // pred_check_branch
      %11 = sbr.rel (0) target = $region9
    $region8: #{tpu_custom_call.1} parent=1 // pred_region
      _
    $region9: #{tpu_custom_call.1} parent=1 // pred_fallthru
      _
    %v12 = vld [vmem:[%s1] sm:$0xff]
    %v13 = vld [vmem:[%s0] sm:$0xff]
    %vm14 = vcmask 261120
    %v15 = vsel %vm14, %v12, -inf
    %16 = vmax.xlane.f32.xlu0 %v15
    %v17 = vpop.xlane.xlu0 %16
    %v18 = vsub.f32 %v12, %v17
    %v19 = vmul.f32 %v18, 1.442695
    %v20 = vpow.pop %v19
    %v21 = vsel %vm14, %v20, 0.0
    %22 = vadd.xlane.f32.xlu0 %v21
    %v23 = vpop.xlane.xlu0 %22
    %v24 = vlaneseq
    %v25 = vand.u32 %v24, 127
    %26 = vset.pattern.permute.xlu0 0
    %27 = vperm.xlu0 %26, %v13
    %v28 = vpop.permute.xlu0 %27
    %vm29 = vcmp.eq.s32.totalorder %v25, %v28
    %v30 = vsel %vm29, %v12, 0.0
    %v31 = vsel %vm14, %v30, 0.0
    %32 = vadd.xlane.f32.xlu0 %v31
    %v33 = vpop.xlane.xlu0 %32
    %v34 = vlog2.pop %v23
    %v35 = vmul.f32 %v34, 0.6931472
    %v36 = vsub.f32 %v33, %v17
    %v37 = vsub.f32 %v35, %v36
    %v38 = vsub.f32 0.0, %v37
    %v39 = vmul.f32 %v38, 1.442695
    %v40 = vpow.pop %v39
    %v41 = vsub.f32 1.0, %v40
    %v42 = vmax.f32 %v41, 0.0
    %v43 = vmul.f32 %v42, %v42
    %v44 = vmul.f32 %v43, 0.25
    %v45 = vmul.f32 %v44, %v37
    %v46 = vrot.slane %v45, 4
    %v47 = vadd.f32 %v45, %v46
    %v48 = vrot.slane %v47, 2
    %v49 = vadd.f32 %v47, %v48
    %v50 = vrot.slane %v49, 1
    %v51 = vadd.f32 %v49, %v50
    %vm52 = vcmask 0
    %53 = vst.msk [vmem:[#allocation2] sm:$0x1] %vm52, %v51
    // Predicated region
    $region10: #{tpu_custom_call.1} parent=1 // pred_check
      _
    $region11: #{tpu_custom_call.1} parent=1 // pred_check_branch
      %55 = sbr.rel (0) target = $region13
    $region12: #{tpu_custom_call.1} parent=1 // pred_region
      %57 = vsyncadd [#allocation3], 0
      %s59 = sshll.u32 [#allocation2], 4
      %s60 = int_to_ptr.vmem [resolvable:$true] %s59
      %s61 = sshll.u32 %s2, 4
      %s62 = int_to_ptr.hbm [resolvable:$true] %s61
      %64 = dma.vmem_to_hbm [thread:$0]  %s60, 16, %s62, [#allocation3]
    $region13: #{tpu_custom_call.1} parent=1 // pred_fallthru
      _
    // Predicated region
    $region14: #{tpu_custom_call.1} parent=1 // pred_check
      _
    $region15: #{tpu_custom_call.1} parent=1 // pred_check_branch
      %66 = sbr.rel (0) target = $region17
    $region16: #{tpu_custom_call.1} parent=1 // pred_region
      %68 = dma.done [#allocation3], 16
    $region17: #{tpu_custom_call.1} parent=1 // pred_fallthru
      _
    %69 = vsyncpa [#allocation3], 1

</llo_original>
